<compile_context>
chip_gen: v7x
topology: tpu7x:2x2x1
jax: 0.10.0
libtpu: 0.0.40
codegen_flags: <defaults>
</compile_context>

<pallas_src>
import functools

import jax
import jax.numpy as jnp
from jax.experimental import pallas as pl
from jax.experimental.pallas import tpu as pltpu


# ----------------------------------------------------------------------------
# Dense input-projection kernel: (R, F) @ (F, 4H) + b  (layer-0 ih path, hoisted
# out of the recurrence so the serial loop only carries the h-recurrences).
# ----------------------------------------------------------------------------
def _proj_kernel(x_ref, w_ref, b_ref, o_ref):
    o_ref[...] = (jnp.dot(x_ref[...], w_ref[...],
                          preferred_element_type=jnp.float32) + b_ref[...])


def run_input_proj(x2d, wT, b, row_tile=512):
    R, F = x2d.shape
    G = wT.shape[1]
    tr = min(row_tile, ((R + 7) // 8) * 8)       # row tile, multiple of 8
    n_blocks = -(-R // tr)
    R_pad = n_blocks * tr
    if R_pad != R:
        x2d = jnp.pad(x2d, ((0, R_pad - R), (0, 0)))

    out = pl.pallas_call(
        _proj_kernel,
        out_shape=jax.ShapeDtypeStruct((R_pad, G), jnp.float32),
        grid=(n_blocks,),
        in_specs=[
            pl.BlockSpec((tr, F), lambda i: (i, 0)),
            pl.BlockSpec((F, G), lambda i: (0, 0)),
            pl.BlockSpec((1, G), lambda i: (0, 0)),
        ],
        out_specs=pl.BlockSpec((tr, G), lambda i: (i, 0)),
        compiler_params=pltpu.CompilerParams(
            dimension_semantics=("parallel",)),
    )(x2d, wT, b)
    return out[:R]


# ----------------------------------------------------------------------------
# LSTM recurrence kernel: grid over time blocks, inner pl.loop over steps.
#   xproj_ref : (Tc, B, 4H)  precomputed layer-0 input projection (+bias)
#   whh0_ref  : (H, 4H)      layer-0 hh weights (transposed)
#   w1_ref    : (2H, 4H)     layer-1 [W_ih; W_hh] stacked (transposed)
#   b1_ref    : (1, 4H)      layer-1 summed bias
#   out_ref   : (K, B, H)    h1 at the last K timesteps (resident across grid)
#   h_scr/c_scr: (2, B, H)   per-layer hidden/cell state (persists across grid)
# ----------------------------------------------------------------------------
def _lstm_kernel(xproj_ref, whh0_ref, w1_ref, b1_ref, out_ref, h_scr, c_scr,
                 *, T, Tc, K, H):
    blk = pl.program_id(0)

    @pl.when(blk == 0)
    def _():
        h_scr[...] = jnp.zeros_like(h_scr)
        c_scr[...] = jnp.zeros_like(c_scr)

    B = h_scr.shape[1]
    whh0 = whh0_ref[...]                               # (H, 4H)
    w1 = w1_ref[...]                                   # (2H, 4H)
    b1 = jnp.broadcast_to(b1_ref[...], (B, 4 * H))     # hoisted broadcast

    t0 = blk * Tc
    steps = jnp.minimum(Tc, T - t0)                    # valid steps in this block

    @pl.loop(0, steps)
    def _(s):
        t = t0 + s
        h0 = h_scr[0]
        c0 = c_scr[0]
        h1 = h_scr[1]
        c1 = c_scr[1]

        # ---- layer 0: only the h-recurrence matmul (ih path precomputed) ----
        g0 = xproj_ref[s] + jnp.dot(h0, whh0, preferred_element_type=jnp.float32)
        sg0 = jax.nn.sigmoid(g0)                       # one full-vreg EUP pass
        th0 = jnp.tanh(g0)                             # one full-vreg EUP pass
        c0n = sg0[:, H:2 * H] * c0 + sg0[:, 0:H] * th0[:, 2 * H:3 * H]
        h0n = sg0[:, 3 * H:4 * H] * jnp.tanh(c0n)

        # TODO(synk): inter-layer dropout(p=0.5) omitted (eval/inference semantics).

        # ---- layer 1: fused [x, h] @ [W_ih; W_hh] single matmul ----
        g1 = jnp.dot(jnp.concatenate([h0n, h1], axis=1), w1,
                     preferred_element_type=jnp.float32) + b1
        sg1 = jax.nn.sigmoid(g1)
        th1 = jnp.tanh(g1)
        c1n = sg1[:, H:2 * H] * c1 + sg1[:, 0:H] * th1[:, 2 * H:3 * H]
        h1n = sg1[:, 3 * H:4 * H] * jnp.tanh(c1n)

        h_scr[0] = h0n
        c_scr[0] = c0n
        h_scr[1] = h1n
        c_scr[1] = c1n

        # Keep only the last K timesteps of h1 (all the head ever reads).
        # Writes at t < T-K land on slot 0 and are overwritten at t = T-K,
        # so the final buffer holds h1[T-K .. T-1] in order.
        out_ref[jnp.maximum(t - (T - K), 0)] = h1n


def run_lstm(xproj, whh0T, w1, b1, K, time_tile=256):
    # xproj: (T, B, 4H) ; returns (K, B, H) = h1 at timesteps T-K .. T-1
    T, B, G = xproj.shape
    H = G // 4
    Tc = min(time_tile, T)
    n_blocks = -(-T // Tc)
    T_pad = n_blocks * Tc
    if T_pad != T:
        xproj = jnp.pad(xproj, ((0, T_pad - T), (0, 0), (0, 0)))

    kernel = functools.partial(_lstm_kernel, T=T, Tc=Tc, K=K, H=H)

    grid_spec = pltpu.PrefetchScalarGridSpec(
        num_scalar_prefetch=0,
        grid=(n_blocks,),
        in_specs=[
            pl.BlockSpec((Tc, B, G), lambda i: (i, 0, 0)),   # xproj time block
            pl.BlockSpec((H, G), lambda i: (0, 0)),          # W_hh_l0^T
            pl.BlockSpec((2 * H, G), lambda i: (0, 0)),      # [W_ih_l1^T; W_hh_l1^T]
            pl.BlockSpec((1, G), lambda i: (0, 0)),          # b_l1
        ],
        out_specs=pl.BlockSpec((K, B, H), lambda i: (0, 0, 0)),   # resident tail
        scratch_shapes=[
            pltpu.VMEM((2, B, H), jnp.float32),   # h per layer
            pltpu.VMEM((2, B, H), jnp.float32),   # c per layer
        ],
    )

    return pl.pallas_call(
        kernel,
        out_shape=jax.ShapeDtypeStruct((K, B, H), jnp.float32),
        grid_spec=grid_spec,
        compiler_params=pltpu.CompilerParams(
            dimension_semantics=("arbitrary",)),   # sequential carry over time
    )(xproj, whh0T, w1, b1)


# ----------------------------------------------------------------------------
# Full forward, mirroring SequencePredictor.forward (fresh zero hidden state).
# ----------------------------------------------------------------------------
def sequence_predictor_forward(params, sequences, seq_len, n_hidden):
    N = sequences.shape[0]
    x = sequences.reshape(N, seq_len, -1).astype(jnp.float32)  # (T=N, B=seq_len, F)
    T, B, F = x.shape
    H = n_hidden
    K = -(-N // B)   # ceil(N / seq_len): timesteps the view(...)[-1] trick touches

    wih0T = params["w_ih_l0"].T                                  # (F, 4H)
    whh0T = params["w_hh_l0"].T                                  # (H, 4H)
    b0 = (params["b_ih_l0"] + params["b_hh_l0"]).reshape(1, -1)
    w1 = jnp.concatenate([params["w_ih_l1"].T,
                          params["w_hh_l1"].T], axis=0)          # (2H, 4H)
    b1 = (params["b_ih_l1"] + params["b_hh_l1"]).reshape(1, -1)

    # Hoisted, MXU-efficient layer-0 input projection for all timesteps at once.
    xproj = run_input_proj(x.reshape(T * B, F), wih0T, b0).reshape(T, B, 4 * H)

    tail = run_lstm(xproj, whh0T, w1, b1, K=K)                   # (K, B, H)

    # PyTorch: lstm_out.view(seq_len, N, H)[-1] == last N rows of the flat
    # (T*B, H) buffer == last N rows of the flattened kept tail.
    last_time_step = tail.reshape(K * B, H)[K * B - N:]          # (N, H)

    # Degenerate (N,H)@(H,1) head: plain jnp (a kernel launch would be overhead).
    y = last_time_step @ params["w_lin"].T + params["b_lin"]     # (N, 1)
    return y


# ----------------------------------------------------------------------------
# Pure-JAX reference (same math) for a correctness check.
# ----------------------------------------------------------------------------
def _reference_forward(params, sequences, seq_len, n_hidden):
    N = sequences.shape[0]
    x = sequences.reshape(N, seq_len, -1).astype(jnp.float32)
    T, B, _ = x.shape
    h = jnp.zeros((2, B, n_hidden), jnp.float32)
    c = jnp.zeros((2, B, n_hidden), jnp.float32)
    outs = []
    for t in range(T):
        inp = x[t]
        new_h, new_c = [], []
        for l in range(2):
            wih = params[f"w_ih_l{l}"]
            whh = params[f"w_hh_l{l}"]
            b = params[f"b_ih_l{l}"] + params[f"b_hh_l{l}"]
            gates = inp @ wih.T + h[l] @ whh.T + b
            i, f, g, o = jnp.split(gates, 4, axis=-1)
            cn = jax.nn.sigmoid(f) * c[l] + jax.nn.sigmoid(i) * jnp.tanh(g)
            hn = jax.nn.sigmoid(o) * jnp.tanh(cn)
            new_h.append(hn)
            new_c.append(cn)
            inp = hn
        h = jnp.stack(new_h)
        c = jnp.stack(new_c)
        outs.append(inp)
    lstm_out = jnp.stack(outs)                                    # (N, seq_len, H)
    last = lstm_out.reshape(seq_len, N, n_hidden)[-1]
    return last @ params["w_lin"].T + params["b_lin"]


def init_params(key, n_features, n_hidden):
    k = 1.0 / jnp.sqrt(jnp.float32(n_hidden))
    names_shapes = [
        ("w_ih_l0", (4 * n_hidden, n_features)),
        ("w_hh_l0", (4 * n_hidden, n_hidden)),
        ("b_ih_l0", (4 * n_hidden,)),
        ("b_hh_l0", (4 * n_hidden,)),
        ("w_ih_l1", (4 * n_hidden, n_hidden)),
        ("w_hh_l1", (4 * n_hidden, n_hidden)),
        ("b_ih_l1", (4 * n_hidden,)),
        ("b_hh_l1", (4 * n_hidden,)),
        ("w_lin", (1, n_hidden)),
        ("b_lin", (1,)),
    ]
    params = {}
    keys = jax.random.split(key, len(names_shapes))
    for subkey, (name, shape) in zip(keys, names_shapes):
        params[name] = jax.random.uniform(
            subkey, shape, jnp.float32, minval=-k, maxval=k)
    return params


if __name__ == "__main__":
    n_features, n_hidden, seq_len, batch = 4, 32, 8, 2

    key = jax.random.PRNGKey(0)
    pkey, xkey = jax.random.split(key)
    params = init_params(pkey, n_features, n_hidden)
    sequences = jax.random.normal(xkey, (batch, seq_len, n_features), jnp.float32)

    fwd = functools.partial(sequence_predictor_forward,
                            seq_len=seq_len, n_hidden=n_hidden)
    y = jax.block_until_ready(fwd(params, sequences))

    y_ref = _reference_forward(params, sequences, seq_len, n_hidden)
    assert y.shape == (batch, 1)
    assert jnp.allclose(y, y_ref, atol=1e-5, rtol=1e-5), (y, y_ref)

    print("KERNEL_OK")
</pallas_src>

<mosaic_0001>
module attributes {stable_mosaic.version = 11 : i64} {
  func.func @_proj_kernel(%arg0: i32, %arg1: memref<16x4xf32, #tpu.memory_space<vmem>>, %arg2: memref<4x128xf32, #tpu.memory_space<vmem>>, %arg3: memref<1x128xf32, #tpu.memory_space<vmem>>, %arg4: memref<16x128xf32, #tpu.memory_space<vmem>>) attributes {dimension_semantics = [#tpu.dimension_semantics<parallel>], iteration_bounds = array<i64: 1>, scalar_prefetch = 0 : i64, scratch_operands = 0 : i64, tpu.core_type = #tpu.core_type<tc>, window_params = [{transform_indices = @transform_0, window_bounds = array<i64: 16, 4>}, {pipeline_mode = #tpu.pipeline_mode<synchronous>, transform_indices = @transform_1, window_bounds = array<i64: 4, 128>}, {pipeline_mode = #tpu.pipeline_mode<synchronous>, transform_indices = @transform_2, window_bounds = array<i64: 1, 128>}, {transform_indices = @transform_3, window_bounds = array<i64: 16, 128>}]} {
    %c0 = arith.constant 0 : index
    %c0_0 = arith.constant 0 : index
    %0 = vector.load %arg1[%c0, %c0_0] : memref<16x4xf32, #tpu.memory_space<vmem>>, vector<16x4xf32>
    %c0_1 = arith.constant 0 : index
    %c0_2 = arith.constant 0 : index
    %1 = vector.load %arg2[%c0_1, %c0_2] : memref<4x128xf32, #tpu.memory_space<vmem>>, vector<4x128xf32>
    %cst = arith.constant dense<0.000000e+00> : vector<16x128xf32>
    %2 = tpu.matmul %0, %1, %cst {dimension_numbers = #tpu.dot_dimension_numbers<[1], [0], [0], [1], [0, 0, 1, 1], [], []>} : vector<16x4xf32>, vector<4x128xf32>, vector<16x128xf32> -> vector<16x128xf32>
    %c0_3 = arith.constant 0 : index
    %c0_4 = arith.constant 0 : index
    %3 = vector.load %arg3[%c0_3, %c0_4] : memref<1x128xf32, #tpu.memory_space<vmem>>, vector<1x128xf32>
    %4 = vector.broadcast %3 : vector<1x128xf32> to vector<16x128xf32>
    %5 = arith.addf %2, %4 : vector<16x128xf32>
    %c0_5 = arith.constant 0 : index
    %c0_6 = arith.constant 0 : index
    %6 = vector.load %arg4[%c0_5, %c0_6] : memref<16x128xf32, #tpu.memory_space<vmem>>, vector<16x128xf32>
    tpu.vector_store %arg4[%c0_5, %c0_6], %5 {strides = array<i32>} : memref<16x128xf32, #tpu.memory_space<vmem>>, vector<16x128xf32>,
    return
  }
  func.func @transform_0(%arg0: i32) -> (i32, i32) {
    %c0_i32 = arith.constant 0 : i32
    %c0_i32_0 = arith.constant 0 : i32
    return %arg0, %c0_i32 : i32, i32
  }
  func.func @transform_1(%arg0: i32) -> (i32, i32) {
    %c0_i32 = arith.constant 0 : i32
    %c0_i32_0 = arith.constant 0 : i32
    %c0_i32_1 = arith.constant 0 : i32
    return %c0_i32, %c0_i32_0 : i32, i32
  }
  func.func @transform_2(%arg0: i32) -> (i32, i32) {
    %c0_i32 = arith.constant 0 : i32
    %c0_i32_0 = arith.constant 0 : i32
    %c0_i32_1 = arith.constant 0 : i32
    return %c0_i32, %c0_i32_0 : i32, i32
  }
  func.func @transform_3(%arg0: i32) -> (i32, i32) {
    %c0_i32 = arith.constant 0 : i32
    %c0_i32_0 = arith.constant 0 : i32
    return %arg0, %c0_i32 : i32, i32
  }
}

</mosaic_0001>

<llo_original>
// kernel: tpu_custom_call.1
$region0: #{tpu_custom_call.1}
  #allocation0 [shape = 'u32[]', space=smem, size = 0x4, offset = 0x4, fixed_abs, tag = 'smem constant byte address 0x4 - core index']
  #allocation1 [shape = 'u32[144,128]{1,0:T(1,128)}', space=vmem, size = 0x12000, scoped, tag = 'internal scratch']
  %s0 = inlined_call_operand.vmem [shape: f32[16,4], index: 0, kind: input, shape index: {}]
  %s1 = inlined_call_operand.vmem [shape: f32[4,128], index: 1, kind: input, shape index: {}]
  %s2 = inlined_call_operand.vmem [shape: f32[1,128], index: 2, kind: input, shape index: {}]
  %s3 = inlined_call_operand.hbm [shape: f32[16,128], index: 3, kind: output, shape index: {}]
  %s4 = sld [smem:[#allocation0]]
  $region22: #{tpu_custom_call.1} parent=0
    _
  %s6 = ssub.s32 1, %s4
  %s7 = scalar_select 0, %s6, %s4
  $region1: #{tpu_custom_call.1} parent=0
    #allocation2 [shape = 'u8[8192]{0}', space=vmem, size = 0x2000, scoped, tag = 'output window, operand 0, single buffered']
    #allocation3 [shape = 's32[1]{0}', space=sflag, size = 0x4, scoped, tag = 'scoped memory for tpu_custom_call.1']
    %8 = vsyncpa [#allocation3], 0
    // Predicated region
    $region2: #{tpu_custom_call.1} parent=1 // pred_check
      _
    $region3: #{tpu_custom_call.1} parent=1 // pred_check_branch
      %10 = sbr.rel (0) target = $region5
    $region4: #{tpu_custom_call.1} parent=1 // pred_region
      _
    $region5: #{tpu_custom_call.1} parent=1 // pred_fallthru
      _
    // Predicated region
    $region6: #{tpu_custom_call.1} parent=1 // pred_check
      _
    $region7: #{tpu_custom_call.1} parent=1 // pred_check_branch
      %12 = sbr.rel (0) target = $region9
    $region8: #{tpu_custom_call.1} parent=1 // pred_region
      _
    $region9: #{tpu_custom_call.1} parent=1 // pred_fallthru
      _
    // Predicated region
    $region10: #{tpu_custom_call.1} parent=1 // pred_check
      _
    $region11: #{tpu_custom_call.1} parent=1 // pred_check_branch
      %14 = sbr.rel (0) target = $region13
    $region12: #{tpu_custom_call.1} parent=1 // pred_region
      _
    $region13: #{tpu_custom_call.1} parent=1 // pred_fallthru
      _
    %v15 = vld [vmem:[%s0] sm:$0xff]
    %v16 = vld [vmem:[%s0 + $0x8] sm:$0xff]
    %v17 = vld [vmem:[%s1] sm:$0xf]
    %v18 = vld [vmem:[%s2] sm:$0x1]
    %v20 = vlaneseq
    %v21 = vshrl.u32 %v20, 7
    %v22 = vsub.s32 0, %v21
    %v23 = vrot.slane %v18, %v22
    %vm25 = vcmask 31744
    %v27 = vsel %vm25, %v15, 0
    %v30 = vsel %vm25, %v16, 0
    %vm32 = vcmask 1043456
    %v34 = vsel %vm32, %v17, 0
    %36 = vmatprep.subr.mxu0 0.0
    %37 = vmatpush1.msra.mxu0 %v34
    %38 = vmatprep.subr.mxu0 0.0
    %39 = vmatpush1.msra.mxu0 0.0
    %40 = vmatprep.subr.mxu0 0.0
    %41 = vmatpush1.msra.mxu0 0.0
    %42 = vmatprep.subr.mxu0 0.0
    %43 = vmatpush1.msra.mxu0 0.0
    %44 = vmatprep.subr.mxu0 0.0
    %45 = vmatpush1.msra.mxu0 0.0
    %46 = vmatprep.subr.mxu0 0.0
    %47 = vmatpush1.msra.mxu0 0.0
    %48 = vmatprep.subr.mxu0 0.0
    %49 = vmatpush1.msra.mxu0 0.0
    %50 = vmatprep.subr.mxu0 0.0
    %51 = vmatpush1.msra.mxu0 0.0
    %52 = vmatprep.subr.mxu0 0.0
    %53 = vmatpush1.msra.mxu0 0.0
    %54 = vmatprep.subr.mxu0 0.0
    %55 = vmatpush1.msra.mxu0 0.0
    %56 = vmatprep.subr.mxu0 0.0
    %57 = vmatpush1.msra.mxu0 0.0
    %58 = vmatprep.subr.mxu0 0.0
    %59 = vmatpush1.msra.mxu0 0.0
    %60 = vmatprep.subr.mxu0 0.0
    %61 = vmatpush1.msra.mxu0 0.0
    %62 = vmatprep.subr.mxu0 0.0
    %63 = vmatpush1.msra.mxu0 0.0
    %64 = vmatprep.subr.mxu0 0.0
    %65 = vmatpush1.msra.mxu0 0.0
    %66 = vmatprep.subr.mxu0 0.0
    %67 = vmatpush1.msra.mxu0 0.0
    %68 = vmatprep.subr.mxu0 0.0
    %69 = vmatpush1.msra.mxu0 0.0
    %70 = vmatprep.subr.mxu0 0.0
    %71 = vmatpush1.msra.mxu0 0.0
    %72 = vmatprep.subr.mxu0 0.0
    %73 = vmatpush1.msra.mxu0 0.0
    %74 = vmatprep.subr.mxu0 0.0
    %75 = vmatpush1.msra.mxu0 0.0
    %76 = vmatprep.subr.mxu0 0.0
    %77 = vmatpush1.msra.mxu0 0.0
    %78 = vmatprep.subr.mxu0 0.0
    %79 = vmatpush1.msra.mxu0 0.0
    %80 = vmatprep.subr.mxu0 0.0
    %81 = vmatpush1.msra.mxu0 0.0
    %82 = vmatprep.subr.mxu0 0.0
    %83 = vmatpush1.msra.mxu0 0.0
    %84 = vmatprep.subr.mxu0 0.0
    %85 = vmatpush1.msra.mxu0 0.0
    %86 = vmatprep.subr.mxu0 0.0
    %87 = vmatpush1.msra.mxu0 0.0
    %88 = vmatprep.subr.mxu0 0.0
    %89 = vmatpush1.msra.mxu0 0.0
    %90 = vmatprep.subr.mxu0 0.0
    %91 = vmatpush1.msra.mxu0 0.0
    %92 = vmatprep.subr.mxu0 0.0
    %93 = vmatpush1.msra.mxu0 0.0
    %94 = vmatprep.subr.mxu0 0.0
    %95 = vmatpush1.msra.mxu0 0.0
    %96 = vmatprep.subr.mxu0 0.0
    %97 = vmatpush1.msra.mxu0 0.0
    %98 = vmatprep.subr.mxu0 0.0
    %99 = vmatpush1.msra.mxu0 0.0
    %100 = vmatprep.mubr.f32.mxu0 0.0
    %101 = vmatmul.mubr.f32.gmra.mrb[0].mxu0 %v27
    %v102 = vpop.f32.mrb[0].mxu0
    %v103 = vadd.f32 %v23, %v102
    %v104 = vpop.f32.mrb[0].mxu0
    %105 = vmatprep.mubr.f32.mxu0 0.0
    %106 = vmatmul.mubr.f32.gmra.mrb[0].mxu0 %v30
    %v107 = vpop.f32.mrb[0].mxu0
    %v108 = vadd.f32 %v23, %v107
    %v109 = vpop.f32.mrb[0].mxu0
    %110 = vdwg.mxu0
    %111 = vst [vmem:[#allocation2] sm:$0xff] %v103
    %112 = vst [vmem:[#allocation2 + $0x8] sm:$0xff] %v108
    // Predicated region
    $region14: #{tpu_custom_call.1} parent=1 // pred_check
      _
    $region15: #{tpu_custom_call.1} parent=1 // pred_check_branch
      %114 = sbr.rel (0) target = $region17
    $region16: #{tpu_custom_call.1} parent=1 // pred_region
      %s116 = ssub.s32 256, 256
      %117 = vsyncadd [#allocation3], %s116
      %s118 = sshll.u32 [#allocation2], 4
      %s119 = int_to_ptr.vmem [resolvable:$true] %s118
      %124 = dma.vmem_to_hbm [thread:$0]  %s119, 256, %s3, [#allocation3], 128, 128, 8
    $region17: #{tpu_custom_call.1} parent=1 // pred_fallthru
      _
    // Predicated region
    $region18: #{tpu_custom_call.1} parent=1 // pred_check
      _
    $region19: #{tpu_custom_call.1} parent=1 // pred_check_branch
      %126 = sbr.rel (0) target = $region21
    $region20: #{tpu_custom_call.1} parent=1 // pred_region
      %127 = dma.done [#allocation3], 256
    $region21: #{tpu_custom_call.1} parent=1 // pred_fallthru
      _
    %128 = vsyncpa [#allocation3], 1

</llo_original>
